<compile_context>
chip_gen: v6e
topology: v6e:2x2x1
jax: 0.10.0
libtpu: 0.0.40
codegen_flags: <defaults>
</compile_context>

<pallas_src>
import math
import functools

import jax
import jax.numpy as jnp
from jax.experimental import pallas as pl
from jax.experimental.pallas import tpu as pltpu


_LANE = 128
_MXU_TILE = 256          # M-tile floor/alignment: full MXU width on v6e/v7x, 2x on v5e


def _round_up(x, m):
    return ((x + m - 1) // m) * m


# Resident (constant-index) BlockSpec factory: single-buffer if supported.
def _make_resident_spec_factory():
    idx0 = lambda i: (0, 0)
    if hasattr(pl, "Buffered"):
        try:
            pl.BlockSpec((8, 128), idx0, pipeline_mode=pl.Buffered(1))
            return (lambda shape: pl.BlockSpec(shape, idx0,
                                               pipeline_mode=pl.Buffered(1))), 1
        except TypeError:
            pass
    return (lambda shape: pl.BlockSpec(shape, idx0)), 2


_RESIDENT_SPEC, _RESIDENT_BUFS = _make_resident_spec_factory()


# ----------------------------- glue: timestep embedding ----------------------
def timestep_embedding(timesteps, dim, max_period=10000):
    """JAX port of the PyTorch sinusoidal embedding ([cos, sin] order, as in spec)."""
    half = dim // 2
    freqs = jnp.exp(
        -math.log(max_period) * jnp.arange(0, half, dtype=jnp.float32) / half
    )
    args = timesteps[:, None].astype(jnp.float32) * freqs[None, :]
    emb = jnp.concatenate([jnp.cos(args), jnp.sin(args)], axis=-1)
    if dim % 2:
        emb = jnp.concatenate([emb, jnp.zeros_like(emb[:, :1])], axis=-1)
    return emb


# --------------------------------- Pallas kernel -----------------------------
def _dnn_kernel(x_ref, *rest, n_layers, compute_dtype):
    """One batch-block of a stack of (dot + bias) layers, tanh after all but last.

    rest = (w0, b0, w1, b1, ..., out_ref).  Weights are `compute_dtype`;
    accumulation, bias add and tanh are f32 (VPU/EUP-safe on v5e), then cast back
    to `compute_dtype` for the next MXU dot.
    """
    out_ref = rest[-1]
    prefs = rest[:-1]

    # TODO(synk): nn.Dropout(0.5) is identity at inference; F.normalize skipped (norm=False).
    h = x_ref[...]                                   # (TB, D0_pad), compute_dtype
    acc = None
    for li in range(n_layers):
        w = prefs[2 * li][...]                       # (Din_pad, Dout_pad), compute_dtype
        b = prefs[2 * li + 1][...]                   # (1, Dout_pad), f32
        acc = jnp.dot(h, w, preferred_element_type=jnp.float32) + b
        if li != n_layers - 1:
            h = jnp.tanh(acc).astype(compute_dtype)  # tanh on EUP in f32, recast for MXU
    out_ref[...] = acc.astype(out_ref.dtype)


# --------------------------------- wrapper ------------------------------------
def dnn_forward(noise_emb, con_emb, timesteps, params, *, in_dims, out_dims,
                emb_size, compute_dtype=jnp.bfloat16, out_dtype=None,
                batch_block=512):
    """params: dict with 'emb_w' [E,E], 'emb_b' [1,E],
    'in_w'/'in_b', 'out_w'/'out_b' lists of ([d_in, d_out], [1, d_out])."""
    assert out_dims[0] == in_dims[-1], "In and out dims must match."
    if out_dtype is None:
        out_dtype = compute_dtype
    d_noise = in_dims[0]
    assert noise_emb.shape[-1] == d_noise
    assert con_emb.shape[-1] == d_noise

    N = noise_emb.shape[0]
    temb = timestep_embedding(timesteps, emb_size)   # parameter-free glue

    # ---- fold emb_layer into first in_layer (exact: two back-to-back linears) ----
    w0 = params["in_w"][0]
    b0 = params["in_b"][0]
    w0_top = w0[:d_noise, :]
    w0_mid = w0[d_noise:d_noise + emb_size, :]
    w0_bot = w0[d_noise + emb_size:, :]
    w0_fold = jnp.concatenate([w0_top, params["emb_w"] @ w0_mid, w0_bot], axis=0)
    b0_fold = b0 + params["emb_b"] @ w0_mid

    weights = [w0_fold] + list(params["in_w"][1:]) + list(params["out_w"])
    biases = [b0_fold] + list(params["in_b"][1:]) + list(params["out_b"])
    n_layers = len(weights)

    # ---- pad every feature dim to a multiple of 128 (lane-dense loads/stores) ----
    layer_dims = [w.shape[0] for w in weights] + [weights[-1].shape[1]]
    padded_dims = [_round_up(d, _LANE) for d in layer_dims]

    w_pad, b_pad = [], []
    for li, (w, b) in enumerate(zip(weights, biases)):
        dip, dop = padded_dims[li], padded_dims[li + 1]
        wp = jnp.zeros((dip, dop), jnp.float32).at[:w.shape[0], :w.shape[1]].set(w)
        bp = jnp.zeros((1, dop), jnp.float32).at[:, :b.shape[-1]].set(b.reshape(1, -1))
        w_pad.append(wp.astype(compute_dtype))   # bf16 for the MXU
        b_pad.append(bp)                         # bias stays f32 (f32 add + tanh)

    d_in = 2 * d_noise + emb_size
    d_in_pad = padded_dims[0]
    d_out = layer_dims[-1]
    d_out_pad = padded_dims[-1]

    # HBM-side concat, already in compute_dtype (no f32 intermediate).
    x = jnp.concatenate([noise_emb.astype(compute_dtype),
                         temb.astype(compute_dtype),
                         con_emb.astype(compute_dtype)], axis=-1)

    # ---- VMEM budget (conservative: v7x per-TC VMEM is 64 MiB) ----
    try:
        vmem_cap = int(pltpu.get_tpu_info().vmem_capacity_bytes)
    except Exception:
        vmem_cap = 64 << 20
    budget = min((vmem_cap * 6) // 10, 48 << 20)

    itemsize_c = jnp.dtype(compute_dtype).itemsize
    itemsize_o = jnp.dtype(out_dtype).itemsize
    weight_bytes = _RESIDENT_BUFS * sum(      # single-buffered resident params
        wi.size * wi.dtype.itemsize + bi.size * bi.dtype.itemsize
        for wi, bi in zip(w_pad, b_pad))
    per_row = (2 * itemsize_c * d_in_pad      # double-buffered input block
               + 2 * itemsize_o * d_out_pad   # double-buffered output block
               + 2 * 4 * max(padded_dims))    # two live f32 temps (acc, tanh input)

    # ---- batch tile: MXU-aligned, never below 256 rows ----
    tb = _round_up(max(batch_block, 1), _MXU_TILE)
    tb = min(tb, _round_up(max(N, 1), _MXU_TILE))   # don't over-tile tiny batches
    tb = max(tb, _MXU_TILE)
    while tb > _MXU_TILE and (tb * per_row + weight_bytes) > budget:
        tb = max(_MXU_TILE, _round_up(tb // 2, _MXU_TILE))
    # If weights alone blow the budget we keep tb at the floor (see TODO above).

    n_pad = _round_up(N, tb)
    x = jnp.pad(x, ((0, n_pad - N), (0, d_in_pad - d_in)))
    grid = (n_pad // tb,)

    # ---- specs: activations tiled over batch, params VMEM-resident (1 buffer) ----
    in_specs = [pl.BlockSpec((tb, d_in_pad), lambda i: (i, 0))]
    flat_params = []
    for wi, bi in zip(w_pad, b_pad):
        in_specs.append(_RESIDENT_SPEC(wi.shape))
        in_specs.append(_RESIDENT_SPEC(bi.shape))
        flat_params += [wi, bi]
    out_spec = pl.BlockSpec((tb, d_out_pad), lambda i: (i, 0))

    flops = 2 * n_pad * sum(wi.shape[0] * wi.shape[1] for wi in w_pad)
    transcendentals = n_pad * sum(wi.shape[1] for wi in w_pad[:-1])
    bytes_accessed = (x.size * x.dtype.itemsize
                      + sum(wi.size * wi.dtype.itemsize for wi in w_pad)
                      + sum(bi.size * bi.dtype.itemsize for bi in b_pad)
                      + n_pad * d_out_pad * itemsize_o)
    cost = pl.CostEstimate(flops=flops, transcendentals=transcendentals,
                           bytes_accessed=bytes_accessed)

    need = tb * per_row + weight_bytes + (4 << 20)
    vmem_limit = int(min(64 << 20, max(need, 32 << 20)))

    kernel = functools.partial(_dnn_kernel, n_layers=n_layers,
                               compute_dtype=compute_dtype)

    out_padded = pl.pallas_call(
        kernel,
        out_shape=jax.ShapeDtypeStruct((n_pad, d_out_pad), out_dtype),
        grid=grid,
        in_specs=in_specs,
        out_specs=out_spec,
        compiler_params=pltpu.CompilerParams(
            dimension_semantics=("parallel",),   # both TCs on v7x; no-op on v5e/v6e
            vmem_limit_bytes=vmem_limit),
        cost_estimate=cost,
    )(x, *flat_params)

    return out_padded[:N, :d_out]


# --------------------------- deterministic param init -------------------------
def init_params(key, in_dims, out_dims, emb_size):
    """Mirrors DNN.init_weights: weight ~ N(0, sqrt(2/(fan_in+fan_out))),
    bias ~ N(0, 0.001). Weights stored as [d_in, d_out] (transposed vs torch)."""
    in_dims_temp = [in_dims[0] * 2 + emb_size] + list(in_dims[1:])
    out_dims_temp = list(out_dims)

    def linear(key, d_in, d_out):
        kw, kb = jax.random.split(key)
        std = math.sqrt(2.0 / (d_in + d_out))
        w = std * jax.random.normal(kw, (d_in, d_out), dtype=jnp.float32)
        b = 0.001 * jax.random.normal(kb, (1, d_out), dtype=jnp.float32)
        return w, b

    keys = jax.random.split(key, 1 + (len(in_dims_temp) - 1) + (len(out_dims_temp) - 1))
    k = 0
    emb_w, emb_b = linear(keys[k], emb_size, emb_size); k += 1

    in_w, in_b = [], []
    for d_in, d_out in zip(in_dims_temp[:-1], in_dims_temp[1:]):
        w, b = linear(keys[k], d_in, d_out); k += 1
        in_w.append(w); in_b.append(b)

    out_w, out_b = [], []
    for d_in, d_out in zip(out_dims_temp[:-1], out_dims_temp[1:]):
        w, b = linear(keys[k], d_in, d_out); k += 1
        out_w.append(w); out_b.append(b)

    return {"emb_w": emb_w, "emb_b": emb_b,
            "in_w": in_w, "in_b": in_b, "out_w": out_w, "out_b": out_b}


# ------------------------------- plain-JAX reference ---------------------------
def dnn_reference(noise_emb, con_emb, timesteps, params, *, emb_size):
    temb = timestep_embedding(timesteps, emb_size)
    emb = temb @ params["emb_w"] + params["emb_b"]
    h = jnp.concatenate([noise_emb, emb, con_emb], axis=-1)
    for w, b in zip(params["in_w"], params["in_b"]):
        h = jnp.tanh(h @ w + b)
    n_out = len(params["out_w"])
    for i, (w, b) in enumerate(zip(params["out_w"], params["out_b"])):
        h = h @ w + b
        if i != n_out - 1:
            h = jnp.tanh(h)
    return h


if __name__ == "__main__":
    # Small shapes: batch=8, latent dim 64, hidden 32, time-emb 16.
    in_dims = [64, 32]
    out_dims = [32, 64]     # out_dims[0] == in_dims[-1]
    emb_size = 16
    N = 8

    key = jax.random.PRNGKey(0)
    k_n, k_c, k_t, k_p = jax.random.split(key, 4)
    noise_emb = jax.random.normal(k_n, (N, in_dims[0]), dtype=jnp.float32)
    con_emb = jax.random.normal(k_c, (N, in_dims[0]), dtype=jnp.float32)
    timesteps = jax.random.randint(k_t, (N,), 0, 1000).astype(jnp.float32)

    params = init_params(k_p, in_dims, out_dims, emb_size)
    ref = dnn_reference(noise_emb, con_emb, timesteps, params, emb_size=emb_size)

    # Strict correctness check in f32 compute / f32 output.
    out_f32 = dnn_forward(noise_emb, con_emb, timesteps, params,
                          in_dims=in_dims, out_dims=out_dims, emb_size=emb_size,
                          compute_dtype=jnp.float32, out_dtype=jnp.float32)
    out_f32 = jax.block_until_ready(out_f32)
    assert out_f32.shape == (N, out_dims[-1])
    assert jnp.allclose(out_f32, ref, atol=1e-4, rtol=1e-4), "f32 kernel mismatch vs reference"

    # Default (perf) path: bf16 operands + bf16 output, f32 accumulate — looser tol.
    out_bf16 = dnn_forward(noise_emb, con_emb, timesteps, params,
                           in_dims=in_dims, out_dims=out_dims, emb_size=emb_size,
                           compute_dtype=jnp.bfloat16)
    out_bf16 = jax.block_until_ready(out_bf16)
    assert out_bf16.shape == (N, out_dims[-1])
    assert jnp.allclose(out_bf16.astype(jnp.float32), ref, atol=5e-2, rtol=5e-2), \
        "bf16 kernel mismatch vs reference"

    print("KERNEL_OK")
</pallas_src>

<mosaic_0001>
module attributes {stable_mosaic.version = 11 : i64} {
  func.func @_dnn_kernel(%arg0: i32, %arg1: memref<256x256xf32, #tpu.memory_space<vmem>>, %arg2: memref<256x128xf32, #tpu.memory_space<vmem>>, %arg3: memref<1x128xf32, #tpu.memory_space<vmem>>, %arg4: memref<128x128xf32, #tpu.memory_space<vmem>>, %arg5: memref<1x128xf32, #tpu.memory_space<vmem>>, %arg6: memref<256x128xf32, #tpu.memory_space<vmem>>) attributes {dimension_semantics = [#tpu.dimension_semantics<parallel>], iteration_bounds = array<i64: 1>, scalar_prefetch = 0 : i64, scratch_operands = 0 : i64, tpu.core_type = #tpu.core_type<tc>, window_params = [{transform_indices = @transform_0, window_bounds = array<i64: 256, 256>}, {pipeline_mode = #tpu.pipeline_mode<synchronous>, transform_indices = @transform_1, window_bounds = array<i64: 256, 128>}, {pipeline_mode = #tpu.pipeline_mode<synchronous>, transform_indices = @transform_2, window_bounds = array<i64: 1, 128>}, {pipeline_mode = #tpu.pipeline_mode<synchronous>, transform_indices = @transform_3, window_bounds = array<i64: 128, 128>}, {pipeline_mode = #tpu.pipeline_mode<synchronous>, transform_indices = @transform_4, window_bounds = array<i64: 1, 128>}, {transform_indices = @transform_5, window_bounds = array<i64: 256, 128>}]} {
    %c0 = arith.constant 0 : index
    %c0_0 = arith.constant 0 : index
    %0 = vector.load %arg1[%c0, %c0_0] : memref<256x256xf32, #tpu.memory_space<vmem>>, vector<256x256xf32>
    %c0_1 = arith.constant 0 : index
    %c0_2 = arith.constant 0 : index
    %1 = vector.load %arg2[%c0_1, %c0_2] : memref<256x128xf32, #tpu.memory_space<vmem>>, vector<256x128xf32>
    %c0_3 = arith.constant 0 : index
    %c0_4 = arith.constant 0 : index
    %2 = vector.load %arg3[%c0_3, %c0_4] : memref<1x128xf32, #tpu.memory_space<vmem>>, vector<1x128xf32>
    %cst = arith.constant dense<0.000000e+00> : vector<256x128xf32>
    %3 = tpu.matmul %0, %1, %cst {dimension_numbers = #tpu.dot_dimension_numbers<[1], [0], [0], [1], [0, 0, 1, 1], [], []>} : vector<256x256xf32>, vector<256x128xf32>, vector<256x128xf32> -> vector<256x128xf32>
    %4 = vector.broadcast %2 : vector<1x128xf32> to vector<256x128xf32>
    %5 = arith.addf %3, %4 : vector<256x128xf32>
    %6 = math.tanh %5 : vector<256x128xf32>
    %c0_5 = arith.constant 0 : index
    %c0_6 = arith.constant 0 : index
    %7 = vector.load %arg4[%c0_5, %c0_6] : memref<128x128xf32, #tpu.memory_space<vmem>>, vector<128x128xf32>
    %c0_7 = arith.constant 0 : index
    %c0_8 = arith.constant 0 : index
    %8 = vector.load %arg5[%c0_7, %c0_8] : memref<1x128xf32, #tpu.memory_space<vmem>>, vector<1x128xf32>
    %cst_9 = arith.constant dense<0.000000e+00> : vector<256x128xf32>
    %9 = tpu.matmul %6, %7, %cst_9 {dimension_numbers = #tpu.dot_dimension_numbers<[1], [0], [0], [1], [0, 0, 1, 1], [], []>} : vector<256x128xf32>, vector<128x128xf32>, vector<256x128xf32> -> vector<256x128xf32>
    %10 = vector.broadcast %8 : vector<1x128xf32> to vector<256x128xf32>
    %11 = arith.addf %9, %10 : vector<256x128xf32>
    %c0_10 = arith.constant 0 : index
    %c0_11 = arith.constant 0 : index
    %12 = vector.load %arg6[%c0_10, %c0_11] : memref<256x128xf32, #tpu.memory_space<vmem>>, vector<256x128xf32>
    tpu.vector_store %arg6[%c0_10, %c0_11], %11 {strides = array<i32>} : memref<256x128xf32, #tpu.memory_space<vmem>>, vector<256x128xf32>,
    return
  }
  func.func @transform_0(%arg0: i32) -> (i32, i32) {
    %c0_i32 = arith.constant 0 : i32
    %c0_i32_0 = arith.constant 0 : i32
    return %arg0, %c0_i32 : i32, i32
  }
  func.func @transform_1(%arg0: i32) -> (i32, i32) {
    %c0_i32 = arith.constant 0 : i32
    %c0_i32_0 = arith.constant 0 : i32
    %c0_i32_1 = arith.constant 0 : i32
    return %c0_i32, %c0_i32_0 : i32, i32
  }
  func.func @transform_2(%arg0: i32) -> (i32, i32) {
    %c0_i32 = arith.constant 0 : i32
    %c0_i32_0 = arith.constant 0 : i32
    %c0_i32_1 = arith.constant 0 : i32
    return %c0_i32, %c0_i32_0 : i32, i32
  }
  func.func @transform_3(%arg0: i32) -> (i32, i32) {
    %c0_i32 = arith.constant 0 : i32
    %c0_i32_0 = arith.constant 0 : i32
    %c0_i32_1 = arith.constant 0 : i32
    return %c0_i32, %c0_i32_0 : i32, i32
  }
  func.func @transform_4(%arg0: i32) -> (i32, i32) {
    %c0_i32 = arith.constant 0 : i32
    %c0_i32_0 = arith.constant 0 : i32
    %c0_i32_1 = arith.constant 0 : i32
    return %c0_i32, %c0_i32_0 : i32, i32
  }
  func.func @transform_5(%arg0: i32) -> (i32, i32) {
    %c0_i32 = arith.constant 0 : i32
    %c0_i32_0 = arith.constant 0 : i32
    return %arg0, %c0_i32 : i32, i32
  }
}

</mosaic_0001>

<llo_original>
// kernel: tpu_custom_call.1
$region0: #{tpu_custom_call.1}
  #allocation0 [shape = 'u32[]', space=smem, size = 0x4, offset = 0x4, fixed_abs, tag = 'smem constant byte address 0x4 - core index']
  #allocation1 [shape = 'u32[144,128]{1,0:T(1,128)}', space=vmem, size = 0x12000, scoped, tag = 'internal scratch']
  %s0 = inlined_call_operand.hbm [shape: f32[256,256], index: 0, kind: input, shape index: {}]
  %s1 = inlined_call_operand.hbm [shape: f32[256,128], index: 1, kind: input, shape index: {}]
  %s2 = inlined_call_operand.vmem [shape: f32[1,128], index: 2, kind: input, shape index: {}]
  %s3 = inlined_call_operand.hbm [shape: f32[128,128], index: 3, kind: input, shape index: {}]
  %s4 = inlined_call_operand.vmem [shape: f32[1,128], index: 4, kind: input, shape index: {}]
  %s5 = inlined_call_operand.hbm [shape: f32[256,128], index: 5, kind: output, shape index: {}]
  %s6 = sld [smem:[#allocation0]]
  $region42: #{tpu_custom_call.1} parent=0
    _
  %s8 = ssub.s32 1, %s6
  %s9 = scalar_select 0, %s8, %s6
  $region1: #{tpu_custom_call.1} parent=0
    #allocation2 [shape = 'u8[262144]{0}', space=vmem, size = 0x40000, scoped, tag = 'input window, operand 0, single buffered']
    #allocation3 [shape = 's32[1]{0}', space=sflag, size = 0x4, scoped, tag = 'scoped memory for tpu_custom_call.1']
    #allocation4 [shape = 's32[1]{0}', space=sflag, size = 0x4, scoped, tag = 'scoped memory for tpu_custom_call.1']
    #allocation5 [shape = 'u8[131072]{0}', space=vmem, size = 0x20000, scoped, tag = 'input window, operand 1, single buffered']
    #allocation6 [shape = 's32[1]{0}', space=sflag, size = 0x4, scoped, tag = 'scoped memory for tpu_custom_call.1']
    #allocation7 [shape = 'u8[65536]{0}', space=vmem, size = 0x10000, scoped, tag = 'input window, operand 3, single buffered']
    #allocation8 [shape = 'u8[131072]{0}', space=vmem, size = 0x20000, scoped, tag = 'output window, operand 0, single buffered']
    %10 = vsyncpa [#allocation3], 0
    %11 = vsyncpa [#allocation6], 0
    %12 = vsyncpa [#allocation4], 0
    // Predicated region
    $region2: #{tpu_custom_call.1} parent=1 // pred_check
      _
    $region3: #{tpu_custom_call.1} parent=1 // pred_check_branch
      %14 = sbr.rel (0) target = $region5
    $region4: #{tpu_custom_call.1} parent=1 // pred_region
      %s16 = ssub.s32 8192, 8192
      %17 = vsyncadd [#allocation3], %s16
      %s18 = sshll.u32 [#allocation2], 4
      %s19 = int_to_ptr.vmem [resolvable:$true] %s18
      %24 = dma.hbm_to_vmem [thread:$0]  %s0, 8192, %s19, [#allocation3], 256, 256, 16
    $region5: #{tpu_custom_call.1} parent=1 // pred_fallthru
      _
    // Predicated region
    $region6: #{tpu_custom_call.1} parent=1 // pred_check
      _
    $region7: #{tpu_custom_call.1} parent=1 // pred_check_branch
      %26 = sbr.rel (0) target = $region9
    $region8: #{tpu_custom_call.1} parent=1 // pred_region
      %s28 = ssub.s32 4096, 4096
      %29 = vsyncadd [#allocation6], %s28
      %s30 = sshll.u32 [#allocation5], 4
      %s31 = int_to_ptr.vmem [resolvable:$true] %s30
      %36 = dma.hbm_to_vmem [thread:$0]  %s1, 4096, %s31, [#allocation6], 128, 128, 8
    $region9: #{tpu_custom_call.1} parent=1 // pred_fallthru
      _
    // Predicated region
    $region10: #{tpu_custom_call.1} parent=1 // pred_check
      _
    $region11: #{tpu_custom_call.1} parent=1 // pred_check_branch
      %38 = sbr.rel (0) target = $region13
    $region12: #{tpu_custom_call.1} parent=1 // pred_region
      _
    $region13: #{tpu_custom_call.1} parent=1 // pred_fallthru
      _
    // Predicated region
    $region14: #{tpu_custom_call.1} parent=1 // pred_check
      _
    $region15: #{tpu_custom_call.1} parent=1 // pred_check_branch
      %40 = sbr.rel (0) target = $region17
    $region16: #{tpu_custom_call.1} parent=1 // pred_region
      %s42 = ssub.s32 2048, 2048
      %43 = vsyncadd [#allocation6], %s42
      %s44 = sshll.u32 [#allocation7], 4
      %s45 = int_to_ptr.vmem [resolvable:$true] %s44
      %50 = dma.hbm_to_vmem [thread:$0]  %s3, 2048, %s45, [#allocation6], 128, 128, 8
    $region17: #{tpu_custom_call.1} parent=1 // pred_fallthru
      _
    // Predicated region
    $region18: #{tpu_custom_call.1} parent=1 // pred_check
      _
    $region19: #{tpu_custom_call.1} parent=1 // pred_check_branch
      %52 = sbr.rel (0) target = $region21
    $region20: #{tpu_custom_call.1} parent=1 // pred_region
      _
    $region21: #{tpu_custom_call.1} parent=1 // pred_fallthru
      _
    // Predicated region
    $region22: #{tpu_custom_call.1} parent=1 // pred_check
      _
    $region23: #{tpu_custom_call.1} parent=1 // pred_check_branch
      %54 = sbr.rel (0) target = $region25
    $region24: #{tpu_custom_call.1} parent=1 // pred_region
      %55 = dma.done [#allocation3], 8192
    $region25: #{tpu_custom_call.1} parent=1 // pred_fallthru
      _
    // Predicated region
    $region26: #{tpu_custom_call.1} parent=1 // pred_check
      _
    $region27: #{tpu_custom_call.1} parent=1 // pred_check_branch
      %57 = sbr.rel (0) target = $region29
    $region28: #{tpu_custom_call.1} parent=1 // pred_region
      %58 = dma.done [#allocation6], 4096
    $region29: #{tpu_custom_call.1} parent=1 // pred_fallthru
      _
    // Predicated region
    $region30: #{tpu_custom_call.1} parent=1 // pred_check
      _
    $region31: #{tpu_custom_call.1} parent=1 // pred_check_branch
      %60 = sbr.rel (0) target = $region33
    $region32: #{tpu_custom_call.1} parent=1 // pred_region
      %61 = dma.done [#allocation6], 2048
    $region33: #{tpu_custom_call.1} parent=1 // pred_fallthru
      _
    %v62 = vld [vmem:[#allocation2] sm:$0xff]
    %v63 = vld [vmem:[#allocation2 + $0x8] sm:$0xff]
    %v64 = vld [vmem:[#allocation2 + $0x10] sm:$0xff]
    %v65 = vld [vmem:[#allocation2 + $0x18] sm:$0xff]
    %v66 = vld [vmem:[#allocation2 + $0x20] sm:$0xff]
    %v67 = vld [vmem:[#allocation2 + $0x28] sm:$0xff]
    %v68 = vld [vmem:[#allocation2 + $0x30] sm:$0xff]
    %v69 = vld [vmem:[#allocation2 + $0x38] sm:$0xff]
    %v70 = vld [vmem:[#allocation2 + $0x40] sm:$0xff]
    %v71 = vld [vmem:[#allocation2 + $0x48] sm:$0xff]
    %v72 = vld [vmem:[#allocation2 + $0x50] sm:$0xff]
    %v73 = vld [vmem:[#allocation2 + $0x58] sm:$0xff]
    %v74 = vld [vmem:[#allocation2 + $0x60] sm:$0xff]
    %v75 = vld [vmem:[#allocation2 + $0x68] sm:$0xff]
    %v76 = vld [vmem:[#allocation2 + $0x70] sm:$0xff]
    %v77 = vld [vmem:[#allocation2 + $0x78] sm:$0xff]
    %v78 = vld [vmem:[#allocation2 + $0x80] sm:$0xff]
    %v79 = vld [vmem:[#allocation2 + $0x88] sm:$0xff]
    %v80 = vld [vmem:[#allocation2 + $0x90] sm:$0xff]
    %v81 = vld [vmem:[#allocation2 + $0x98] sm:$0xff]
    %v82 = vld [vmem:[#allocation2 + $0xa0] sm:$0xff]
    %v83 = vld [vmem:[#allocation2 + $0xa8] sm:$0xff]
    %v84 = vld [vmem:[#allocation2 + $0xb0] sm:$0xff]
    %v85 = vld [vmem:[#allocation2 + $0xb8] sm:$0xff]
    %v86 = vld [vmem:[#allocation2 + $0xc0] sm:$0xff]
    %v87 = vld [vmem:[#allocation2 + $0xc8] sm:$0xff]
    %v88 = vld [vmem:[#allocation2 + $0xd0] sm:$0xff]
    %v89 = vld [vmem:[#allocation2 + $0xd8] sm:$0xff]
    %v90 = vld [vmem:[#allocation2 + $0xe0] sm:$0xff]
    %v91 = vld [vmem:[#allocation2 + $0xe8] sm:$0xff]
    %v92 = vld [vmem:[#allocation2 + $0xf0] sm:$0xff]
    %v93 = vld [vmem:[#allocation2 + $0xf8] sm:$0xff]
    %v94 = vld [vmem:[#allocation2 + $0x100] sm:$0xff]
    %v95 = vld [vmem:[#allocation2 + $0x108] sm:$0xff]
    %v96 = vld [vmem:[#allocation2 + $0x110] sm:$0xff]
    %v97 = vld [vmem:[#allocation2 + $0x118] sm:$0xff]
    %v98 = vld [vmem:[#allocation2 + $0x120] sm:$0xff]
    %v99 = vld [vmem:[#allocation2 + $0x128] sm:$0xff]
    %v100 = vld [vmem:[#allocation2 + $0x130] sm:$0xff]
    %v101 = vld [vmem:[#allocation2 + $0x138] sm:$0xff]
    %v102 = vld [vmem:[#allocation2 + $0x140] sm:$0xff]
    %v103 = vld [vmem:[#allocation2 + $0x148] sm:$0xff]
    %v104 = vld [vmem:[#allocation2 + $0x150] sm:$0xff]
    %v105 = vld [vmem:[#allocation2 + $0x158] sm:$0xff]
    %v106 = vld [vmem:[#allocation2 + $0x160] sm:$0xff]
    %v107 = vld [vmem:[#allocation2 + $0x168] sm:$0xff]
    %v108 = vld [vmem:[#allocation2 + $0x170] sm:$0xff]
    %v109 = vld [vmem:[#allocation2 + $0x178] sm:$0xff]
    %v110 = vld [vmem:[#allocation2 + $0x180] sm:$0xff]
    %v111 = vld [vmem:[#allocation2 + $0x188] sm:$0xff]
    %v112 = vld [vmem:[#allocation2 + $0x190] sm:$0xff]
    %v113 = vld [vmem:[#allocation2 + $0x198] sm:$0xff]
    %v114 = vld [vmem:[#allocation2 + $0x1a0] sm:$0xff]
    %v115 = vld [vmem:[#allocation2 + $0x1a8] sm:$0xff]
    %v116 = vld [vmem:[#allocation2 + $0x1b0] sm:$0xff]
    %v117 = vld [vmem:[#allocation2 + $0x1b8] sm:$0xff]
    %v118 = vld [vmem:[#allocation2 + $0x1c0] sm:$0xff]
    %v119 = vld [vmem:[#allocation2 + $0x1c8] sm:$0xff]
    %v120 = vld [vmem:[#allocation2 + $0x1d0] sm:$0xff]
    %v121 = vld [vmem:[#allocation2 + $0x1d8] sm:$0xff]
    %v122 = vld [vmem:[#allocation2 + $0x1e0] sm:$0xff]
    %v123 = vld [vmem:[#allocation2 + $0x1e8] sm:$0xff]
    %v124 = vld [vmem:[#allocation2 + $0x1f0] sm:$0xff]
    %v125 = vld [vmem:[#allocation2 + $0x1f8] sm:$0xff]
    %v126 = vld [vmem:[#allocation5] sm:$0xff]
    %v127 = vld [vmem:[#allocation5 + $0x8] sm:$0xff]
    %v128 = vld [vmem:[#allocation5 + $0x10] sm:$0xff]
    %v129 = vld [vmem:[#allocation5 + $0x18] sm:$0xff]
    %v130 = vld [vmem:[#allocation5 + $0x20] sm:$0xff]
    %v131 = vld [vmem:[#allocation5 + $0x28] sm:$0xff]
    %v132 = vld [vmem:[#allocation5 + $0x30] sm:$0xff]
    %v133 = vld [vmem:[#allocation5 + $0x38] sm:$0xff]
    %v134 = vld [vmem:[#allocation5 + $0x40] sm:$0xff]
    %v135 = vld [vmem:[#allocation5 + $0x48] sm:$0xff]
    %v136 = vld [vmem:[#allocation5 + $0x50] sm:$0xff]
    %v137 = vld [vmem:[#allocation5 + $0x58] sm:$0xff]
    %v138 = vld [vmem:[#allocation5 + $0x60] sm:$0xff]
    %v139 = vld [vmem:[#allocation5 + $0x68] sm:$0xff]
    %v140 = vld [vmem:[#allocation5 + $0x70] sm:$0xff]
    %v141 = vld [vmem:[#allocation5 + $0x78] sm:$0xff]
    %v142 = vld [vmem:[#allocation5 + $0x80] sm:$0xff]
    %v143 = vld [vmem:[#allocation5 + $0x88] sm:$0xff]
    %v144 = vld [vmem:[#allocation5 + $0x90] sm:$0xff]
    %v145 = vld [vmem:[#allocation5 + $0x98] sm:$0xff]
    %v146 = vld [vmem:[#allocation5 + $0xa0] sm:$0xff]
    %v147 = vld [vmem:[#allocation5 + $0xa8] sm:$0xff]
    %v148 = vld [vmem:[#allocation5 + $0xb0] sm:$0xff]
    %v149 = vld [vmem:[#allocation5 + $0xb8] sm:$0xff]
    %v150 = vld [vmem:[#allocation5 + $0xc0] sm:$0xff]
    %v151 = vld [vmem:[#allocation5 + $0xc8] sm:$0xff]
    %v152 = vld [vmem:[#allocation5 + $0xd0] sm:$0xff]
    %v153 = vld [vmem:[#allocation5 + $0xd8] sm:$0xff]
    %v154 = vld [vmem:[#allocation5 + $0xe0] sm:$0xff]
    %v155 = vld [vmem:[#allocation5 + $0xe8] sm:$0xff]
    %v156 = vld [vmem:[#allocation5 + $0xf0] sm:$0xff]
    %v157 = vld [vmem:[#allocation5 + $0xf8] sm:$0xff]
    %v158 = vld [vmem:[%s2] sm:$0x1]
    %v160 = vlaneseq
    %v161 = vshrl.u32 %v160, 7
    %v162 = vsub.s32 0, %v161
    %v163 = vrot.slane %v158, %v162
    %165 = vmatprep.subr.mxu0 0.0
    %166 = vmatpush1.msra.mxu0 %v141
    %167 = vmatprep.subr.mxu0 0.0
    %168 = vmatpush1.msra.mxu0 %v140
    %169 = vmatprep.subr.mxu0 0.0
    %170 = vmatpush1.msra.mxu0 %v139
    %171 = vmatprep.subr.mxu0 0.0
    %172 = vmatpush1.msra.mxu0 %v138
    %173 = vmatprep.subr.mxu0 0.0
    %174 = vmatpush1.msra.mxu0 %v137
    %175 = vmatprep.subr.mxu0 0.0
    %176 = vmatpush1.msra.mxu0 %v136
    %177 = vmatprep.subr.mxu0 0.0
    %178 = vmatpush1.msra.mxu0 %v135
    %179 = vmatprep.subr.mxu0 0.0
    %180 = vmatpush1.msra.mxu0 %v134
    %181 = vmatprep.subr.mxu0 0.0
    %182 = vmatpush1.msra.mxu0 %v133
    %183 = vmatprep.subr.mxu0 0.0
    %184 = vmatpush1.msra.mxu0 %v132
    %185 = vmatprep.subr.mxu0 0.0
    %186 = vmatpush1.msra.mxu0 %v131
    %187 = vmatprep.subr.mxu0 0.0
    %188 = vmatpush1.msra.mxu0 %v130
    %189 = vmatprep.subr.mxu0 0.0
    %190 = vmatpush1.msra.mxu0 %v129
    %191 = vmatprep.subr.mxu0 0.0
    %192 = vmatpush1.msra.mxu0 %v128
    %193 = vmatprep.subr.mxu0 0.0
    %194 = vmatpush1.msra.mxu0 %v127
    %195 = vmatprep.subr.mxu0 0.0
    %196 = vmatpush1.msra.mxu0 %v126
    %197 = vmatprep.subr.mxu0 0.0
    %198 = vmatpush2.msra.mxu0 %v157
    %199 = vmatprep.subr.mxu0 0.0
    %200 = vmatpush2.msra.mxu0 %v156
    %201 = vmatprep.subr.mxu0 0.0
    %202 = vmatpush2.msra.mxu0 %v155
    %203 = vmatprep.subr.mxu0 0.0
    %204 = vmatpush2.msra.mxu0 %v154
    %205 = vmatprep.subr.mxu0 0.0
    %206 = vmatpush2.msra.mxu0 %v153
    %207 = vmatprep.subr.mxu0 0.0
    %208 = vmatpush2.msra.mxu0 %v152
    %209 = vmatprep.subr.mxu0 0.0
    %210 = vmatpush2.msra.mxu0 %v151
    %211 = vmatprep.subr.mxu0 0.0
    %212 = vmatpush2.msra.mxu0 %v150
    %213 = vmatprep.subr.mxu0 0.0
    %214 = vmatpush2.msra.mxu0 %v149
    %215 = vmatprep.subr.mxu0 0.0
    %216 = vmatpush2.msra.mxu0 %v148
    %217 = vmatprep.subr.mxu0 0.0
    %218 = vmatpush2.msra.mxu0 %v147
    %219 = vmatprep.subr.mxu0 0.0
    %220 = vmatpush2.msra.mxu0 %v146
    %221 = vmatprep.subr.mxu0 0.0
    %222 = vmatpush2.msra.mxu0 %v145
    %223 = vmatprep.subr.mxu0 0.0
    %224 = vmatpush2.msra.mxu0 %v144
    %225 = vmatprep.subr.mxu0 0.0
    %226 = vmatpush2.msra.mxu0 %v143
    %227 = vmatprep.subr.mxu0 0.0
    %228 = vmatpush2.msra.mxu0 %v142
    %229 = vmatprep.mubr.f32.mxu0 %v63
    %230 = vmatmul.mubr.f32.gmra.mxu0 %v62
    %v231 = vpop.f32.mrf.mxu0
    %v232 = vadd.f32 %v163, %v231
    %v233 = vpop.f32.mrf.mxu0
    %234 = vmatprep.mubr.f32.mxu0 %v65
    %235 = vmatmul.mubr.f32.gmra.mxu0 %v64
    %v236 = vpop.f32.mrf.mxu0
    %v237 = vadd.f32 %v163, %v236
    %v238 = vpop.f32.mrf.mxu0
    %239 = vmatprep.mubr.f32.mxu0 %v67
    %240 = vmatmul.mubr.f32.gmra.mxu0 %v66
    %v241 = vpop.f32.mrf.mxu0
    %v242 = vadd.f32 %v163, %v241
    %v243 = vpop.f32.mrf.mxu0
    %244 = vmatprep.mubr.f32.mxu0 %v69
    %245 = vmatmul.mubr.f32.gmra.mxu0 %v68
    %v246 = vpop.f32.mrf.mxu0
    %v247 = vadd.f32 %v163, %v246
    %v248 = vpop.f32.mrf.mxu0
    %249 = vmatprep.mubr.f32.mxu0 %v71
    %250 = vmatmul.mubr.f32.gmra.mxu0 %v70
    %v251 = vpop.f32.mrf.mxu0
    %v252 = vadd.f32 %v163, %v251
    %v253 = vpop.f32.mrf.mxu0
    %254 = vmatprep.mubr.f32.mxu0 %v73
    %255 = vmatmul.mubr.f32.gmra.mxu0 %v72
    %v256 = vpop.f32.mrf.mxu0
    %v257 = vadd.f32 %v163, %v256
    %v258 = vpop.f32.mrf.mxu0
    %259 = vmatprep.mubr.f32.mxu0 %v75
    %260 = vmatmul.mubr.f32.gmra.mxu0 %v74
    %v261 = vpop.f32.mrf.mxu0
    %v262 = vadd.f32 %v163, %v261
    %v263 = vpop.f32.mrf.mxu0
    %264 = vmatprep.mubr.f32.mxu0 %v77
    %265 = vmatmul.mubr.f32.gmra.mxu0 %v76
    %v266 = vpop.f32.mrf.mxu0
    %v267 = vadd.f32 %v163, %v266
    %v268 = vpop.f32.mrf.mxu0
    %269 = vmatprep.mubr.f32.mxu0 %v79
    %270 = vmatmul.mubr.f32.gmra.mxu0 %v78
    %v271 = vpop.f32.mrf.mxu0
    %v272 = vadd.f32 %v163, %v271
    %v273 = vpop.f32.mrf.mxu0
    %274 = vmatprep.mubr.f32.mxu0 %v81
    %275 = vmatmul.mubr.f32.gmra.mxu0 %v80
    %v276 = vpop.f32.mrf.mxu0
    %v277 = vadd.f32 %v163, %v276
    %v278 = vpop.f32.mrf.mxu0
    %279 = vmatprep.mubr.f32.mxu0 %v83
    %280 = vmatmul.mubr.f32.gmra.mxu0 %v82
    %v281 = vpop.f32.mrf.mxu0
    %v282 = vadd.f32 %v163, %v281
    %v283 = vpop.f32.mrf.mxu0
    %284 = vmatprep.mubr.f32.mxu0 %v85
    %285 = vmatmul.mubr.f32.gmra.mxu0 %v84
    %v286 = vpop.f32.mrf.mxu0
    %v287 = vadd.f32 %v163, %v286
    %v288 = vpop.f32.mrf.mxu0
    %289 = vmatprep.mubr.f32.mxu0 %v87
    %290 = vmatmul.mubr.f32.gmra.mxu0 %v86
    %v291 = vpop.f32.mrf.mxu0
    %v292 = vadd.f32 %v163, %v291
    %v293 = vpop.f32.mrf.mxu0
    %294 = vmatprep.mubr.f32.mxu0 %v89
    %295 = vmatmul.mubr.f32.gmra.mxu0 %v88
    %v296 = vpop.f32.mrf.mxu0
    %v297 = vadd.f32 %v163, %v296
    %v298 = vpop.f32.mrf.mxu0
    %299 = vmatprep.mubr.f32.mxu0 %v91
    %300 = vmatmul.mubr.f32.gmra.mxu0 %v90
    %v301 = vpop.f32.mrf.mxu0
    %v302 = vadd.f32 %v163, %v301
    %v303 = vpop.f32.mrf.mxu0
    %304 = vmatprep.mubr.f32.mxu0 %v93
    %305 = vmatmul.mubr.f32.gmra.mxu0 %v92
    %v306 = vpop.f32.mrf.mxu0
    %v307 = vadd.f32 %v163, %v306
    %v308 = vpop.f32.mrf.mxu0
    %309 = vmatprep.mubr.f32.mxu0 %v95
    %310 = vmatmul.mubr.f32.gmra.mxu0 %v94
    %v311 = vpop.f32.mrf.mxu0
    %v312 = vadd.f32 %v163, %v311
    %v313 = vpop.f32.mrf.mxu0
    %314 = vmatprep.mubr.f32.mxu0 %v97
    %315 = vmatmul.mubr.f32.gmra.mxu0 %v96
    %v316 = vpop.f32.mrf.mxu0
    %v317 = vadd.f32 %v163, %v316
    %v318 = vpop.f32.mrf.mxu0
    %319 = vmatprep.mubr.f32.mxu0 %v99
    %320 = vmatmul.mubr.f32.gmra.mxu0 %v98
    %v321 = vpop.f32.mrf.mxu0
    %v322 = vadd.f32 %v163, %v321
    %v323 = vpop.f32.mrf.mxu0
    %324 = vmatprep.mubr.f32.mxu0 %v101
    %325 = vmatmul.mubr.f32.gmra.mxu0 %v100
    %v326 = vpop.f32.mrf.mxu0
    %v327 = vadd.f32 %v163, %v326
    %v328 = vpop.f32.mrf.mxu0
    %329 = vmatprep.mubr.f32.mxu0 %v103
    %330 = vmatmul.mubr.f32.gmra.mxu0 %v102
    %v331 = vpop.f32.mrf.mxu0
    %v332 = vadd.f32 %v163, %v331
    %v333 = vpop.f32.mrf.mxu0
    %334 = vmatprep.mubr.f32.mxu0 %v105
    %335 = vmatmul.mubr.f32.gmra.mxu0 %v104
    %v336 = vpop.f32.mrf.mxu0
    %v337 = vadd.f32 %v163, %v336
    %v338 = vpop.f32.mrf.mxu0
    %339 = vmatprep.mubr.f32.mxu0 %v107
    %340 = vmatmul.mubr.f32.gmra.mxu0 %v106
    %v341 = vpop.f32.mrf.mxu0
    %v342 = vadd.f32 %v163, %v341
    %v343 = vpop.f32.mrf.mxu0
    %344 = vmatprep.mubr.f32.mxu0 %v109
    %345 = vmatmul.mubr.f32.gmra.mxu0 %v108
    %v346 = vpop.f32.mrf.mxu0
    %v347 = vadd.f32 %v163, %v346
    %v348 = vpop.f32.mrf.mxu0
    %349 = vmatprep.mubr.f32.mxu0 %v111
    %350 = vmatmul.mubr.f32.gmra.mxu0 %v110
    %v351 = vpop.f32.mrf.mxu0
    %v352 = vadd.f32 %v163, %v351
    %v353 = vpop.f32.mrf.mxu0
    %354 = vmatprep.mubr.f32.mxu0 %v113
    %355 = vmatmul.mubr.f32.gmra.mxu0 %v112
    %v356 = vpop.f32.mrf.mxu0
    %v357 = vadd.f32 %v163, %v356
    %v358 = vpop.f32.mrf.mxu0
    %359 = vmatprep.mubr.f32.mxu0 %v115
    %360 = vmatmul.mubr.f32.gmra.mxu0 %v114
    %v361 = vpop.f32.mrf.mxu0
    %v362 = vadd.f32 %v163, %v361
    %v363 = vpop.f32.mrf.mxu0
    %364 = vmatprep.mubr.f32.mxu0 %v117
    %365 = vmatmul.mubr.f32.gmra.mxu0 %v116
    %v366 = vpop.f32.mrf.mxu0
    %v367 = vadd.f32 %v163, %v366
    %v368 = vpop.f32.mrf.mxu0
    %369 = vmatprep.mubr.f32.mxu0 %v119
    %370 = vmatmul.mubr.f32.gmra.mxu0 %v118
    %v371 = vpop.f32.mrf.mxu0
    %v372 = vadd.f32 %v163, %v371
    %v373 = vpop.f32.mrf.mxu0
    %374 = vmatprep.mubr.f32.mxu0 %v121
    %375 = vmatmul.mubr.f32.gmra.mxu0 %v120
    %v376 = vpop.f32.mrf.mxu0
    %v377 = vadd.f32 %v163, %v376
    %v378 = vpop.f32.mrf.mxu0
    %379 = vmatprep.mubr.f32.mxu0 %v123
    %380 = vmatmul.mubr.f32.gmra.mxu0 %v122
    %v381 = vpop.f32.mrf.mxu0
    %v382 = vadd.f32 %v163, %v381
    %v383 = vpop.f32.mrf.mxu0
    %384 = vmatprep.mubr.f32.mxu0 %v125
    %385 = vmatmul.mubr.f32.gmra.mxu0 %v124
    %v386 = vpop.f32.mrf.mxu0
    %v387 = vadd.f32 %v163, %v386
    %v388 = vpop.f32.mrf.mxu0
    %389 = vdwg.mxu0
    %v390 = vtanh.pop %v232
    %v391 = vtanh.pop %v237
    %v392 = vtanh.pop %v242
    %v393 = vtanh.pop %v247
    %v394 = vtanh.pop %v252
    %v395 = vtanh.pop %v257
    %v396 = vtanh.pop %v262
    %v397 = vtanh.pop %v267
    %v398 = vtanh.pop %v272
    %v399 = vtanh.pop %v277
    %v400 = vtanh.pop %v282
    %v401 = vtanh.pop %v287
    %v402 = vtanh.pop %v292
    %v403 = vtanh.pop %v297
    %v404 = vtanh.pop %v302
    %v405 = vtanh.pop %v307
    %v406 = vtanh.pop %v312
    %v407 = vtanh.pop %v317
    %v408 = vtanh.pop %v322
    %v409 = vtanh.pop %v327
    %v410 = vtanh.pop %v332
    %v411 = vtanh.pop %v337
    %v412 = vtanh.pop %v342
    %v413 = vtanh.pop %v347
    %v414 = vtanh.pop %v352
    %v415 = vtanh.pop %v357
    %v416 = vtanh.pop %v362
    %v417 = vtanh.pop %v367
    %v418 = vtanh.pop %v372
    %v419 = vtanh.pop %v377
    %v420 = vtanh.pop %v382
    %v421 = vtanh.pop %v387
    %v422 = vld [vmem:[#allocation7] sm:$0xff]
    %v423 = vld [vmem:[#allocation7 + $0x8] sm:$0xff]
    %v424 = vld [vmem:[#allocation7 + $0x10] sm:$0xff]
    %v425 = vld [vmem:[#allocation7 + $0x18] sm:$0xff]
    %v426 = vld [vmem:[#allocation7 + $0x20] sm:$0xff]
    %v427 = vld [vmem:[#allocation7 + $0x28] sm:$0xff]
    %v428 = vld [vmem:[#allocation7 + $0x30] sm:$0xff]
    %v429 = vld [vmem:[#allocation7 + $0x38] sm:$0xff]
    %v430 = vld [vmem:[#allocation7 + $0x40] sm:$0xff]
    %v431 = vld [vmem:[#allocation7 + $0x48] sm:$0xff]
    %v432 = vld [vmem:[#allocation7 + $0x50] sm:$0xff]
    %v433 = vld [vmem:[#allocation7 + $0x58] sm:$0xff]
    %v434 = vld [vmem:[#allocation7 + $0x60] sm:$0xff]
    %v435 = vld [vmem:[#allocation7 + $0x68] sm:$0xff]
    %v436 = vld [vmem:[#allocation7 + $0x70] sm:$0xff]
    %v437 = vld [vmem:[#allocation7 + $0x78] sm:$0xff]
    %v438 = vld [vmem:[%s4] sm:$0x1]
    %v440 = vlaneseq
    %v441 = vshrl.u32 %v440, 7
    %v442 = vsub.s32 0, %v441
    %v443 = vrot.slane %v438, %v442
    %445 = vmatprep.subr.mxu0 0.0
    %446 = vmatpush1.msra.mxu0 %v437
    %447 = vmatprep.subr.mxu0 0.0
    %448 = vmatpush1.msra.mxu0 %v436
    %449 = vmatprep.subr.mxu0 0.0
    %450 = vmatpush1.msra.mxu0 %v435
    %451 = vmatprep.subr.mxu0 0.0
    %452 = vmatpush1.msra.mxu0 %v434
    %453 = vmatprep.subr.mxu0 0.0
    %454 = vmatpush1.msra.mxu0 %v433
    %455 = vmatprep.subr.mxu0 0.0
    %456 = vmatpush1.msra.mxu0 %v432
    %457 = vmatprep.subr.mxu0 0.0
    %458 = vmatpush1.msra.mxu0 %v431
    %459 = vmatprep.subr.mxu0 0.0
    %460 = vmatpush1.msra.mxu0 %v430
    %461 = vmatprep.subr.mxu0 0.0
    %462 = vmatpush1.msra.mxu0 %v429
    %463 = vmatprep.subr.mxu0 0.0
    %464 = vmatpush1.msra.mxu0 %v428
    %465 = vmatprep.subr.mxu0 0.0
    %466 = vmatpush1.msra.mxu0 %v427
    %467 = vmatprep.subr.mxu0 0.0
    %468 = vmatpush1.msra.mxu0 %v426
    %469 = vmatprep.subr.mxu0 0.0
    %470 = vmatpush1.msra.mxu0 %v425
    %471 = vmatprep.subr.mxu0 0.0
    %472 = vmatpush1.msra.mxu0 %v424
    %473 = vmatprep.subr.mxu0 0.0
    %474 = vmatpush1.msra.mxu0 %v423
    %475 = vmatprep.subr.mxu0 0.0
    %476 = vmatpush1.msra.mxu0 %v422
    %477 = vmatprep.subr.mxu0 0.0
    %478 = vmatpush2.msra.mxu0 0.0
    %479 = vmatprep.subr.mxu0 0.0
    %480 = vmatpush2.msra.mxu0 0.0
    %481 = vmatprep.subr.mxu0 0.0
    %482 = vmatpush2.msra.mxu0 0.0
    %483 = vmatprep.subr.mxu0 0.0
    %484 = vmatpush2.msra.mxu0 0.0
    %485 = vmatprep.subr.mxu0 0.0
    %486 = vmatpush2.msra.mxu0 0.0
    %487 = vmatprep.subr.mxu0 0.0
    %488 = vmatpush2.msra.mxu0 0.0
    %489 = vmatprep.subr.mxu0 0.0
    %490 = vmatpush2.msra.mxu0 0.0
    %491 = vmatprep.subr.mxu0 0.0
    %492 = vmatpush2.msra.mxu0 0.0
    %493 = vmatprep.subr.mxu0 0.0
    %494 = vmatpush2.msra.mxu0 0.0
    %495 = vmatprep.subr.mxu0 0.0
    %496 = vmatpush2.msra.mxu0 0.0
    %497 = vmatprep.subr.mxu0 0.0
    %498 = vmatpush2.msra.mxu0 0.0
    %499 = vmatprep.subr.mxu0 0.0
    %500 = vmatpush2.msra.mxu0 0.0
    %501 = vmatprep.subr.mxu0 0.0
    %502 = vmatpush2.msra.mxu0 0.0
    %503 = vmatprep.subr.mxu0 0.0
    %504 = vmatpush2.msra.mxu0 0.0
    %505 = vmatprep.subr.mxu0 0.0
    %506 = vmatpush2.msra.mxu0 0.0
    %507 = vmatprep.subr.mxu0 0.0
    %508 = vmatpush2.msra.mxu0 0.0
    %509 = vmatprep.mubr.f32.mxu0 0.0
    %510 = vmatmul.mubr.f32.gmra.mxu0 %v390
    %v511 = vpop.f32.mrf.mxu0
    %v512 = vadd.f32 %v443, %v511
    %v513 = vpop.f32.mrf.mxu0
    %514 = vmatprep.mubr.f32.mxu0 0.0
    %515 = vmatmul.mubr.f32.gmra.mxu0 %v391
    %v516 = vpop.f32.mrf.mxu0
    %v517 = vadd.f32 %v443, %v516
    %v518 = vpop.f32.mrf.mxu0
    %519 = vmatprep.mubr.f32.mxu0 0.0
    %520 = vmatmul.mubr.f32.gmra.mxu0 %v392
    %v521 = vpop.f32.mrf.mxu0
    %v522 = vadd.f32 %v443, %v521
    %v523 = vpop.f32.mrf.mxu0
    %524 = vmatprep.mubr.f32.mxu0 0.0
    %525 = vmatmul.mubr.f32.gmra.mxu0 %v393
    %v526 = vpop.f32.mrf.mxu0
    %v527 = vadd.f32 %v443, %v526
    %v528 = vpop.f32.mrf.mxu0
    %529 = vmatprep.mubr.f32.mxu0 0.0
    %530 = vmatmul.mubr.f32.gmra.mxu0 %v394
    %v531 = vpop.f32.mrf.mxu0
    %v532 = vadd.f32 %v443, %v531
    %v533 = vpop.f32.mrf.mxu0
    %534 = vmatprep.mubr.f32.mxu0 0.0
    %535 = vmatmul.mubr.f32.gmra.mxu0 %v395
    %v536 = vpop.f32.mrf.mxu0
    %v537 = vadd.f32 %v443, %v536
    %v538 = vpop.f32.mrf.mxu0
    %539 = vmatprep.mubr.f32.mxu0 0.0
    %540 = vmatmul.mubr.f32.gmra.mxu0 %v396
    %v541 = vpop.f32.mrf.mxu0
    %v542 = vadd.f32 %v443, %v541
    %v543 = vpop.f32.mrf.mxu0
    %544 = vmatprep.mubr.f32.mxu0 0.0
    %545 = vmatmul.mubr.f32.gmra.mxu0 %v397
    %v546 = vpop.f32.mrf.mxu0
    %v547 = vadd.f32 %v443, %v546
    %v548 = vpop.f32.mrf.mxu0
    %549 = vmatprep.mubr.f32.mxu0 0.0
    %550 = vmatmul.mubr.f32.gmra.mxu0 %v398
    %v551 = vpop.f32.mrf.mxu0
    %v552 = vadd.f32 %v443, %v551
    %v553 = vpop.f32.mrf.mxu0
    %554 = vmatprep.mubr.f32.mxu0 0.0
    %555 = vmatmul.mubr.f32.gmra.mxu0 %v399
    %v556 = vpop.f32.mrf.mxu0
    %v557 = vadd.f32 %v443, %v556
    %v558 = vpop.f32.mrf.mxu0
    %559 = vmatprep.mubr.f32.mxu0 0.0
    %560 = vmatmul.mubr.f32.gmra.mxu0 %v400
    %v561 = vpop.f32.mrf.mxu0
    %v562 = vadd.f32 %v443, %v561
    %v563 = vpop.f32.mrf.mxu0
    %564 = vmatprep.mubr.f32.mxu0 0.0
    %565 = vmatmul.mubr.f32.gmra.mxu0 %v401
    %v566 = vpop.f32.mrf.mxu0
    %v567 = vadd.f32 %v443, %v566
    %v568 = vpop.f32.mrf.mxu0
    %569 = vmatprep.mubr.f32.mxu0 0.0
    %570 = vmatmul.mubr.f32.gmra.mxu0 %v402
    %v571 = vpop.f32.mrf.mxu0
    %v572 = vadd.f32 %v443, %v571
    %v573 = vpop.f32.mrf.mxu0
    %574 = vmatprep.mubr.f32.mxu0 0.0
    %575 = vmatmul.mubr.f32.gmra.mxu0 %v403
    %v576 = vpop.f32.mrf.mxu0
    %v577 = vadd.f32 %v443, %v576
    %v578 = vpop.f32.mrf.mxu0
    %579 = vmatprep.mubr.f32.mxu0 0.0
    %580 = vmatmul.mubr.f32.gmra.mxu0 %v404
    %v581 = vpop.f32.mrf.mxu0
    %v582 = vadd.f32 %v443, %v581
    %v583 = vpop.f32.mrf.mxu0
    %584 = vmatprep.mubr.f32.mxu0 0.0
    %585 = vmatmul.mubr.f32.gmra.mxu0 %v405
    %v586 = vpop.f32.mrf.mxu0
    %v587 = vadd.f32 %v443, %v586
    %v588 = vpop.f32.mrf.mxu0
    %589 = vmatprep.mubr.f32.mxu0 0.0
    %590 = vmatmul.mubr.f32.gmra.mxu0 %v406
    %v591 = vpop.f32.mrf.mxu0
    %v592 = vadd.f32 %v443, %v591
    %v593 = vpop.f32.mrf.mxu0
    %594 = vmatprep.mubr.f32.mxu0 0.0
    %595 = vmatmul.mubr.f32.gmra.mxu0 %v407
    %v596 = vpop.f32.mrf.mxu0
    %v597 = vadd.f32 %v443, %v596
    %v598 = vpop.f32.mrf.mxu0
    %599 = vmatprep.mubr.f32.mxu0 0.0
    %600 = vmatmul.mubr.f32.gmra.mxu0 %v408
    %v601 = vpop.f32.mrf.mxu0
    %v602 = vadd.f32 %v443, %v601
    %v603 = vpop.f32.mrf.mxu0
    %604 = vmatprep.mubr.f32.mxu0 0.0
    %605 = vmatmul.mubr.f32.gmra.mxu0 %v409
    %v606 = vpop.f32.mrf.mxu0
    %v607 = vadd.f32 %v443, %v606
    %v608 = vpop.f32.mrf.mxu0
    %609 = vmatprep.mubr.f32.mxu0 0.0
    %610 = vmatmul.mubr.f32.gmra.mxu0 %v410
    %v611 = vpop.f32.mrf.mxu0
    %v612 = vadd.f32 %v443, %v611
    %v613 = vpop.f32.mrf.mxu0
    %614 = vmatprep.mubr.f32.mxu0 0.0
    %615 = vmatmul.mubr.f32.gmra.mxu0 %v411
    %v616 = vpop.f32.mrf.mxu0
    %v617 = vadd.f32 %v443, %v616
    %v618 = vpop.f32.mrf.mxu0
    %619 = vmatprep.mubr.f32.mxu0 0.0
    %620 = vmatmul.mubr.f32.gmra.mxu0 %v412
    %v621 = vpop.f32.mrf.mxu0
    %v622 = vadd.f32 %v443, %v621
    %v623 = vpop.f32.mrf.mxu0
    %624 = vmatprep.mubr.f32.mxu0 0.0
    %625 = vmatmul.mubr.f32.gmra.mxu0 %v413
    %v626 = vpop.f32.mrf.mxu0
    %v627 = vadd.f32 %v443, %v626
    %v628 = vpop.f32.mrf.mxu0
    %629 = vmatprep.mubr.f32.mxu0 0.0
    %630 = vmatmul.mubr.f32.gmra.mxu0 %v414
    %v631 = vpop.f32.mrf.mxu0
    %v632 = vadd.f32 %v443, %v631
    %v633 = vpop.f32.mrf.mxu0
    %634 = vmatprep.mubr.f32.mxu0 0.0
    %635 = vmatmul.mubr.f32.gmra.mxu0 %v415
    %v636 = vpop.f32.mrf.mxu0
    %v637 = vadd.f32 %v443, %v636
    %v638 = vpop.f32.mrf.mxu0
    %639 = vmatprep.mubr.f32.mxu0 0.0
    %640 = vmatmul.mubr.f32.gmra.mxu0 %v416
    %v641 = vpop.f32.mrf.mxu0
    %v642 = vadd.f32 %v443, %v641
    %v643 = vpop.f32.mrf.mxu0
    %644 = vmatprep.mubr.f32.mxu0 0.0
    %645 = vmatmul.mubr.f32.gmra.mxu0 %v417
    %v646 = vpop.f32.mrf.mxu0
    %v647 = vadd.f32 %v443, %v646
    %v648 = vpop.f32.mrf.mxu0
    %649 = vmatprep.mubr.f32.mxu0 0.0
    %650 = vmatmul.mubr.f32.gmra.mxu0 %v418
    %v651 = vpop.f32.mrf.mxu0
    %v652 = vadd.f32 %v443, %v651
    %v653 = vpop.f32.mrf.mxu0
    %654 = vmatprep.mubr.f32.mxu0 0.0
    %655 = vmatmul.mubr.f32.gmra.mxu0 %v419
    %v656 = vpop.f32.mrf.mxu0
    %v657 = vadd.f32 %v443, %v656
    %v658 = vpop.f32.mrf.mxu0
    %659 = vmatprep.mubr.f32.mxu0 0.0
    %660 = vmatmul.mubr.f32.gmra.mxu0 %v420
    %v661 = vpop.f32.mrf.mxu0
    %v662 = vadd.f32 %v443, %v661
    %v663 = vpop.f32.mrf.mxu0
    %664 = vmatprep.mubr.f32.mxu0 0.0
    %665 = vmatmul.mubr.f32.gmra.mxu0 %v421
    %v666 = vpop.f32.mrf.mxu0
    %v667 = vadd.f32 %v443, %v666
    %v668 = vpop.f32.mrf.mxu0
    %669 = vdwg.mxu0
    %670 = vst [vmem:[#allocation8] sm:$0xff] %v512
    %671 = vst [vmem:[#allocation8 + $0x8] sm:$0xff] %v517
    %672 = vst [vmem:[#allocation8 + $0x10] sm:$0xff] %v522
    %673 = vst [vmem:[#allocation8 + $0x18] sm:$0xff] %v527
    %674 = vst [vmem:[#allocation8 + $0x20] sm:$0xff] %v532
    %675 = vst [vmem:[#allocation8 + $0x28] sm:$0xff] %v537
    %676 = vst [vmem:[#allocation8 + $0x30] sm:$0xff] %v542
    %677 = vst [vmem:[#allocation8 + $0x38] sm:$0xff] %v547
    %678 = vst [vmem:[#allocation8 + $0x40] sm:$0xff] %v552
    %679 = vst [vmem:[#allocation8 + $0x48] sm:$0xff] %v557
    %680 = vst [vmem:[#allocation8 + $0x50] sm:$0xff] %v562
    %681 = vst [vmem:[#allocation8 + $0x58] sm:$0xff] %v567
    %682 = vst [vmem:[#allocation8 + $0x60] sm:$0xff] %v572
    %683 = vst [vmem:[#allocation8 + $0x68] sm:$0xff] %v577
    %684 = vst [vmem:[#allocation8 + $0x70] sm:$0xff] %v582
    %685 = vst [vmem:[#allocation8 + $0x78] sm:$0xff] %v587
    %686 = vst [vmem:[#allocation8 + $0x80] sm:$0xff] %v592
    %687 = vst [vmem:[#allocation8 + $0x88] sm:$0xff] %v597
    %688 = vst [vmem:[#allocation8 + $0x90] sm:$0xff] %v602
    %689 = vst [vmem:[#allocation8 + $0x98] sm:$0xff] %v607
    %690 = vst [vmem:[#allocation8 + $0xa0] sm:$0xff] %v612
    %691 = vst [vmem:[#allocation8 + $0xa8] sm:$0xff] %v617
    %692 = vst [vmem:[#allocation8 + $0xb0] sm:$0xff] %v622
    %693 = vst [vmem:[#allocation8 + $0xb8] sm:$0xff] %v627
    %694 = vst [vmem:[#allocation8 + $0xc0] sm:$0xff] %v632
    %695 = vst [vmem:[#allocation8 + $0xc8] sm:$0xff] %v637
    %696 = vst [vmem:[#allocation8 + $0xd0] sm:$0xff] %v642
    %697 = vst [vmem:[#allocation8 + $0xd8] sm:$0xff] %v647
    %698 = vst [vmem:[#allocation8 + $0xe0] sm:$0xff] %v652
    %699 = vst [vmem:[#allocation8 + $0xe8] sm:$0xff] %v657
    %700 = vst [vmem:[#allocation8 + $0xf0] sm:$0xff] %v662
    %701 = vst [vmem:[#allocation8 + $0xf8] sm:$0xff] %v667
    // Predicated region
    $region34: #{tpu_custom_call.1} parent=1 // pred_check
      _
    $region35: #{tpu_custom_call.1} parent=1 // pred_check_branch
      %703 = sbr.rel (0) target = $region37
    $region36: #{tpu_custom_call.1} parent=1 // pred_region
      %s705 = ssub.s32 4096, 4096
      %706 = vsyncadd [#allocation4], %s705
      %s707 = sshll.u32 [#allocation8], 4
      %s708 = int_to_ptr.vmem [resolvable:$true] %s707
      %713 = dma.vmem_to_hbm [thread:$0]  %s708, 4096, %s5, [#allocation4], 128, 128, 8
    $region37: #{tpu_custom_call.1} parent=1 // pred_fallthru
      _
    // Predicated region
    $region38: #{tpu_custom_call.1} parent=1 // pred_check
      _
    $region39: #{tpu_custom_call.1} parent=1 // pred_check_branch
      %715 = sbr.rel (0) target = $region41
    $region40: #{tpu_custom_call.1} parent=1 // pred_region
      %716 = dma.done [#allocation4], 4096
    $region41: #{tpu_custom_call.1} parent=1 // pred_fallthru
      _
    %717 = vsyncpa [#allocation3], 1
    %718 = vsyncpa [#allocation6], 1
    %719 = vsyncpa [#allocation4], 1

</llo_original>
